<compile_context>
chip_gen: v5e
topology: v5e:2x2
jax: 0.10.0
libtpu: 0.0.40
codegen_flags: <defaults>
</compile_context>

<pallas_src>
import jax
import jax.numpy as jnp
import numpy as np
from jax.experimental import pallas as pl
from jax.experimental.pallas import tpu as pltpu

P = 128  # padded length (one full lane width)


def _cindex_loss_kernel(pack_ref, o_ref):
    # pack_ref: (8, P) f32, rows = [risk, time, event, 0, ...]
    # o_ref:    (1,)   f32 in SMEM (scalar loss)
    r = pack_ref[0:1, :]   # (1, P)  risk_j across lanes
    t = pack_ref[1:2, :]   # (1, P)  time_j
    ev = pack_ref[2:3, :]  # (1, P)  event_j

    # Fold the e_i gate into the i-side time: censored (e=0) and padded rows
    # get t'_i = +inf, so they can never start a comparable pair.
    ti_src = jnp.where(ev > 0.5, t, jnp.inf)  # (1, P)

    # i-oriented (sublane-varying) operands: broadcast once, one square XLU
    # transpose each.  Materialized exactly once (JAX does not CSE broadcasts).
    ti = jnp.broadcast_to(ti_src, (P, P)).T   # [i, j] = t'_i
    ri = jnp.broadcast_to(r, (P, P)).T        # [i, j] = risk_i

    # Comparable: t'_i < t_j, or tie with j censored (Harrell / lifelines).
    comparable = (ti < t) | ((ti == t) & (ev < 0.5))
    comp_f = comparable.astype(jnp.float32)

    # Concordance credit x2: pred = -risk, so pred_i < pred_j <=> risk_i > risk_j.
    credit2 = (ri > r).astype(jnp.float32) + (ri >= r).astype(jnp.float32)

    num2 = jnp.sum(comp_f * credit2)   # 2x concordant credit
    den = jnp.sum(comp_f)              # number of comparable pairs

    # den == 0 guard: no admissible pairs -> chance-level C = 0.5.
    c = jnp.where(den > 0.0, (0.5 * num2) / jnp.maximum(den, 1.0), 0.5)
    o_ref[0] = 1.0 - c


def con_loss(risk_score, y, e):
    """Pallas implementation of ConLoss.forward. Returns a scalar float32."""
    risk_score = jnp.asarray(risk_score, jnp.float32).reshape(-1)
    y = jnp.asarray(y, jnp.float32).reshape(-1)
    e = jnp.asarray(e, jnp.float32).reshape(-1)
    n = risk_score.shape[0]
    assert n <= P, "this single-block kernel supports N <= 128"
    # TODO(synk): for N > 128, tile the pairwise matrix over a grid (row axis
    # "parallel" for megacore / v7x dual-TC, col axis "arbitrary" last) with
    # num/den scratch accumulators; for many independent losses per step, add
    # a leading grid axis and a lane-dense (1, G) output to amortize launch
    # overhead.  Size tiles for v7x's 64 MiB VMEM.

    pad = P - n
    r_p = jnp.pad(risk_score, (0, pad))                     # raw risk (no negation)
    t_p = jnp.pad(y, (0, pad), constant_values=-jnp.inf)    # time sentinel -inf
    e_p = jnp.pad(e, (0, pad))                              # event sentinel 0
    zeros = jnp.zeros((P,), jnp.float32)

    # One (8, P) pack = one tile-aligned 4 KB DMA; no transposed copy needed.
    row_pack = jnp.stack([r_p, t_p, e_p, zeros, zeros, zeros, zeros, zeros])

    out = pl.pallas_call(
        _cindex_loss_kernel,
        out_shape=jax.ShapeDtypeStruct((1,), jnp.float32),
        in_specs=[pl.BlockSpec(memory_space=pltpu.MemorySpace.VMEM)],
        out_specs=pl.BlockSpec(memory_space=pltpu.MemorySpace.SMEM),
    )(row_pack)
    return out[0]


def _con_loss_ref(risk_score, y, e):
    """Pure-numpy reference of the same concordance-index loss."""
    risk_score = np.asarray(risk_score, np.float64).reshape(-1)
    y = np.asarray(y, np.float64).reshape(-1)
    e = np.asarray(e, np.float64).reshape(-1)
    pred = -risk_score
    num = 0.0
    den = 0.0
    n = len(y)
    for i in range(n):
        if e[i] != 1:
            continue
        for j in range(n):
            if (y[i] < y[j]) or (y[i] == y[j] and e[j] == 0):
                den += 1.0
                if pred[i] < pred[j]:
                    num += 1.0
                elif pred[i] == pred[j]:
                    num += 0.5
    return 1.0 - num / den


if __name__ == "__main__":
    key = jax.random.PRNGKey(0)
    k1, k2, k3 = jax.random.split(key, 3)

    N = 8  # number of samples
    risk_score = jax.random.normal(k1, (N,), jnp.float32)           # model risk scores
    y = jax.random.uniform(k2, (N,), jnp.float32, 0.5, 10.0)        # survival times
    e = (jax.random.uniform(k3, (N,)) > 0.4).astype(jnp.float32)    # event indicators
    e = e.at[0].set(1.0)  # ensure at least one event so C-index is defined

    loss = con_loss(risk_score, y, e)
    jax.block_until_ready(loss)

    ref = _con_loss_ref(np.array(risk_score), np.array(y), np.array(e))
    assert abs(float(loss) - ref) < 1e-5, (float(loss), ref)

    print("KERNEL_OK")
</pallas_src>

<mosaic_0001>
module attributes {stable_mosaic.version = 11 : i64} {
  func.func @_cindex_loss_kernel(%arg0: memref<8x128xf32, #tpu.memory_space<vmem>>, %arg1: memref<1xf32, #tpu.memory_space<smem>>) attributes {dimension_semantics = [], scalar_prefetch = 0 : i64, scratch_operands = 0 : i64, tpu.core_type = #tpu.core_type<tc>} {
    %c0 = arith.constant 0 : index
    %c0_0 = arith.constant 0 : index
    %0 = vector.load %arg0[%c0, %c0_0] : memref<8x128xf32, #tpu.memory_space<vmem>>, vector<1x128xf32>
    %c1 = arith.constant 1 : index
    %c0_1 = arith.constant 0 : index
    %1 = vector.load %arg0[%c1, %c0_1] : memref<8x128xf32, #tpu.memory_space<vmem>>, vector<1x128xf32>
    %c2 = arith.constant 2 : index
    %c0_2 = arith.constant 0 : index
    %2 = vector.load %arg0[%c2, %c0_2] : memref<8x128xf32, #tpu.memory_space<vmem>>, vector<1x128xf32>
    %cst = arith.constant 5.000000e-01 : f32
    %3 = vector.broadcast %cst : f32 to vector<1x128xf32>
    %4 = arith.cmpf ogt, %2, %3 : vector<1x128xf32>
    %cst_3 = arith.constant 0x7F800000 : f32
    %5 = vector.broadcast %cst_3 : f32 to vector<1x128xf32>
    %6 = arith.select %4, %1, %5 : vector<1x128xi1>, vector<1x128xf32>
    %7 = vector.shape_cast %6 : vector<1x128xf32> to vector<1x128xf32>
    %8 = vector.broadcast %7 : vector<1x128xf32> to vector<128x128xf32>
    %9 = tpu.transpose %8, [1, 0] : vector<128x128xf32> -> vector<128x128xf32>
    %10 = vector.shape_cast %0 : vector<1x128xf32> to vector<1x128xf32>
    %11 = vector.broadcast %10 : vector<1x128xf32> to vector<128x128xf32>
    %12 = tpu.transpose %11, [1, 0] : vector<128x128xf32> -> vector<128x128xf32>
    %13 = vector.broadcast %1 : vector<1x128xf32> to vector<128x128xf32>
    %14 = arith.cmpf olt, %9, %13 : vector<128x128xf32>
    %15 = vector.broadcast %1 : vector<1x128xf32> to vector<128x128xf32>
    %16 = arith.cmpf oeq, %9, %15 : vector<128x128xf32>
    %cst_4 = arith.constant 5.000000e-01 : f32
    %17 = vector.broadcast %cst_4 : f32 to vector<1x128xf32>
    %18 = arith.cmpf olt, %2, %17 : vector<1x128xf32>
    %19 = vector.broadcast %18 : vector<1x128xi1> to vector<128x128xi1>
    %20 = arith.andi %16, %19 : vector<128x128xi1>
    %21 = arith.ori %14, %20 : vector<128x128xi1>
    %22 = arith.extui %21 : vector<128x128xi1> to vector<128x128xi32>
    %23 = arith.sitofp %22 : vector<128x128xi32> to vector<128x128xf32>
    %24 = vector.broadcast %0 : vector<1x128xf32> to vector<128x128xf32>
    %25 = arith.cmpf ogt, %12, %24 : vector<128x128xf32>
    %26 = arith.extui %25 : vector<128x128xi1> to vector<128x128xi32>
    %27 = arith.sitofp %26 : vector<128x128xi32> to vector<128x128xf32>
    %28 = vector.broadcast %0 : vector<1x128xf32> to vector<128x128xf32>
    %29 = arith.cmpf oge, %12, %28 : vector<128x128xf32>
    %30 = arith.extui %29 : vector<128x128xi1> to vector<128x128xi32>
    %31 = arith.sitofp %30 : vector<128x128xi32> to vector<128x128xf32>
    %32 = arith.addf %27, %31 : vector<128x128xf32>
    %33 = arith.mulf %23, %32 : vector<128x128xf32>
    %34 = vector.shape_cast %33 : vector<128x128xf32> to vector<1x128x128xf32>
    %cst_5 = arith.constant dense<0.000000e+00> : vector<1xf32>
    %35 = vector.multi_reduction <add>, %34, %cst_5 [1, 2] : vector<1x128x128xf32> to vector<1xf32>
    %36 = vector.shape_cast %35 : vector<1xf32> to vector<1x1x1xf32>
    %37 = vector.extract %36[0, 0, 0] : f32 from vector<1x1x1xf32>
    %38 = vector.shape_cast %23 : vector<128x128xf32> to vector<1x128x128xf32>
    %cst_6 = arith.constant dense<0.000000e+00> : vector<1xf32>
    %39 = vector.multi_reduction <add>, %38, %cst_6 [1, 2] : vector<1x128x128xf32> to vector<1xf32>
    %40 = vector.shape_cast %39 : vector<1xf32> to vector<1x1x1xf32>
    %41 = vector.extract %40[0, 0, 0] : f32 from vector<1x1x1xf32>
    %cst_7 = arith.constant 0.000000e+00 : f32
    %42 = arith.cmpf ogt, %41, %cst_7 : f32
    %cst_8 = arith.constant 5.000000e-01 : f32
    %43 = arith.mulf %cst_8, %37 : f32
    %cst_9 = arith.constant 1.000000e+00 : f32
    %44 = arith.maximumf %41, %cst_9 : f32
    %45 = arith.divf %43, %44 : f32
    %cst_10 = arith.constant 5.000000e-01 : f32
    %46 = arith.select %42, %45, %cst_10 : f32
    %cst_11 = arith.constant 1.000000e+00 : f32
    %47 = arith.subf %cst_11, %46 : f32
    %c0_12 = arith.constant 0 : index
    %48 = memref.load %arg1[%c0_12] : memref<1xf32, #tpu.memory_space<smem>>
    memref.store %47, %arg1[%c0_12] : memref<1xf32, #tpu.memory_space<smem>>
    return
  }
}

</mosaic_0001>

<llo_original>
// kernel: tpu_custom_call.1
$region0: #{tpu_custom_call.1}
  #allocation0 [shape = 'u32[]', space=smem, size = 0x4, offset = 0x4, fixed_abs, tag = 'smem constant byte address 0x4 - core index']
  #allocation1 [shape = 'u32[72,128]{1,0:T(1,128)}', space=vmem, size = 0x9000, scoped, tag = 'internal scratch']
  %s0 = inlined_call_operand.hbm [shape: f32[8,128], index: 0, kind: input, shape index: {}]
  %s1 = inlined_call_operand.hbm [shape: f32[1], index: 1, kind: output, shape index: {}]
  %s2 = sld [smem:[#allocation0]]
  $region18: #{tpu_custom_call.1} parent=0
    _
  %s4 = ssub.s32 1, %s2
  %s5 = scalar_select 0, %s4, %s2
  $region1: #{tpu_custom_call.1} parent=0
    #allocation2 [shape = 'u8[4096]{0}', space=vmem, size = 0x1000, scoped, tag = 'input window, operand 0, single buffered']
    #allocation3 [shape = 's32[1]{0}', space=sflag, size = 0x4, scoped, tag = 'scoped memory for tpu_custom_call.1']
    #allocation4 [shape = 's32[1]{0}', space=sflag, size = 0x4, scoped, tag = 'scoped memory for tpu_custom_call.1']
    #allocation5 [shape = 'u8[512]{0}', space=smem, size = 0x200, scoped, tag = 'output window, operand 0, single buffered']
    %6 = vsyncpa [#allocation3], 0
    %7 = vsyncpa [#allocation4], 0
    // Predicated region
    $region2: #{tpu_custom_call.1} parent=1 // pred_check
      _
    $region3: #{tpu_custom_call.1} parent=1 // pred_check_branch
      %9 = sbr.rel (0) target = $region5
    $region4: #{tpu_custom_call.1} parent=1 // pred_region
      %11 = vsyncadd [#allocation3], 0
      %s13 = sshll.u32 %s0, 4
      %s14 = int_to_ptr.hbm [resolvable:$true] %s13
      %s15 = sshll.u32 [#allocation2], 4
      %s16 = int_to_ptr.vmem [resolvable:$true] %s15
      %18 = dma.hbm_to_vmem [thread:$0]  %s14, 128, %s16, [#allocation3]
    $region5: #{tpu_custom_call.1} parent=1 // pred_fallthru
      _
    // Predicated region
    $region6: #{tpu_custom_call.1} parent=1 // pred_check
      _
    $region7: #{tpu_custom_call.1} parent=1 // pred_check_branch
      %20 = sbr.rel (0) target = $region9
    $region8: #{tpu_custom_call.1} parent=1 // pred_region
      %22 = dma.done [#allocation3], 128
    $region9: #{tpu_custom_call.1} parent=1 // pred_fallthru
      _
    %v23 = vld [vmem:[#allocation2] sm:$0x1]
    %v24 = vld [vmem:[#allocation2 + $0x1] sm:$0x1]
    %v25 = vld [vmem:[#allocation2 + $0x2] sm:$0x1]
    %vm26 = vcmp.gt.f32.partialorder %v25, 0.5
    %v27 = vsel %vm26, %v24, inf
    %v28 = vperm.slane %v27, 0
    %29 = vxpose.xlu0.b32.start [1/16] %v28, 128
    %30 = vxpose.xlu0.b32.cont [2/16] %v28, 128
    %31 = vxpose.xlu0.b32.cont [3/16] %v28, 128
    %32 = vxpose.xlu0.b32.cont [4/16] %v28, 128
    %33 = vxpose.xlu0.b32.cont [5/16] %v28, 128
    %34 = vxpose.xlu0.b32.cont [6/16] %v28, 128
    %35 = vxpose.xlu0.b32.cont [7/16] %v28, 128
    %36 = vxpose.xlu0.b32.cont [8/16] %v28, 128
    %37 = vxpose.xlu0.b32.cont [9/16] %v28, 128
    %38 = vxpose.xlu0.b32.cont [10/16] %v28, 128
    %39 = vxpose.xlu0.b32.cont [11/16] %v28, 128
    %40 = vxpose.xlu0.b32.cont [12/16] %v28, 128
    %41 = vxpose.xlu0.b32.cont [13/16] %v28, 128
    %42 = vxpose.xlu0.b32.cont [14/16] %v28, 128
    %43 = vxpose.xlu0.b32.cont [15/16] %v28, 128
    %44 = vxpose.xlu0.b32.end [16/16] %v28, 128
    %v45 = vpop.trf.xlu0
    %v46 = vpop.trf.xlu0
    %v47 = vpop.trf.xlu0
    %v48 = vpop.trf.xlu0
    %v49 = vpop.trf.xlu0
    %v50 = vpop.trf.xlu0
    %v51 = vpop.trf.xlu0
    %v52 = vpop.trf.xlu0
    %v53 = vpop.trf.xlu0
    %v54 = vpop.trf.xlu0
    %v55 = vpop.trf.xlu0
    %v56 = vpop.trf.xlu0
    %v57 = vpop.trf.xlu0
    %v58 = vpop.trf.xlu0
    %v59 = vpop.trf.xlu0
    %v60 = vpop.trf.xlu0
    %v61 = vperm.slane %v23, 0
    %62 = vxpose.xlu0.b32.start [1/16] %v61, 128
    %63 = vxpose.xlu0.b32.cont [2/16] %v61, 128
    %64 = vxpose.xlu0.b32.cont [3/16] %v61, 128
    %65 = vxpose.xlu0.b32.cont [4/16] %v61, 128
    %66 = vxpose.xlu0.b32.cont [5/16] %v61, 128
    %67 = vxpose.xlu0.b32.cont [6/16] %v61, 128
    %68 = vxpose.xlu0.b32.cont [7/16] %v61, 128
    %69 = vxpose.xlu0.b32.cont [8/16] %v61, 128
    %70 = vxpose.xlu0.b32.cont [9/16] %v61, 128
    %71 = vxpose.xlu0.b32.cont [10/16] %v61, 128
    %72 = vxpose.xlu0.b32.cont [11/16] %v61, 128
    %73 = vxpose.xlu0.b32.cont [12/16] %v61, 128
    %74 = vxpose.xlu0.b32.cont [13/16] %v61, 128
    %75 = vxpose.xlu0.b32.cont [14/16] %v61, 128
    %76 = vxpose.xlu0.b32.cont [15/16] %v61, 128
    %77 = vxpose.xlu0.b32.end [16/16] %v61, 128
    %v78 = vpop.trf.xlu0
    %v79 = vpop.trf.xlu0
    %v80 = vpop.trf.xlu0
    %v81 = vpop.trf.xlu0
    %v82 = vpop.trf.xlu0
    %v83 = vpop.trf.xlu0
    %v84 = vpop.trf.xlu0
    %v85 = vpop.trf.xlu0
    %v86 = vpop.trf.xlu0
    %v87 = vpop.trf.xlu0
    %v88 = vpop.trf.xlu0
    %v89 = vpop.trf.xlu0
    %v90 = vpop.trf.xlu0
    %v91 = vpop.trf.xlu0
    %v92 = vpop.trf.xlu0
    %v93 = vpop.trf.xlu0
    %v94 = vperm.slane %v24, 0
    %vm95 = vcmp.lt.f32.partialorder %v45, %v94
    %vm96 = vcmp.lt.f32.partialorder %v46, %v94
    %vm97 = vcmp.lt.f32.partialorder %v47, %v94
    %vm98 = vcmp.lt.f32.partialorder %v48, %v94
    %vm99 = vcmp.lt.f32.partialorder %v49, %v94
    %vm100 = vcmp.lt.f32.partialorder %v50, %v94
    %vm101 = vcmp.lt.f32.partialorder %v51, %v94
    %vm102 = vcmp.lt.f32.partialorder %v52, %v94
    %vm103 = vcmp.lt.f32.partialorder %v53, %v94
    %vm104 = vcmp.lt.f32.partialorder %v54, %v94
    %vm105 = vcmp.lt.f32.partialorder %v55, %v94
    %vm106 = vcmp.lt.f32.partialorder %v56, %v94
    %vm107 = vcmp.lt.f32.partialorder %v57, %v94
    %vm108 = vcmp.lt.f32.partialorder %v58, %v94
    %vm109 = vcmp.lt.f32.partialorder %v59, %v94
    %vm110 = vcmp.lt.f32.partialorder %v60, %v94
    %vm111 = vcmp.eq.f32.partialorder %v45, %v94
    %vm112 = vcmp.eq.f32.partialorder %v46, %v94
    %vm113 = vcmp.eq.f32.partialorder %v47, %v94
    %vm114 = vcmp.eq.f32.partialorder %v48, %v94
    %vm115 = vcmp.eq.f32.partialorder %v49, %v94
    %vm116 = vcmp.eq.f32.partialorder %v50, %v94
    %vm117 = vcmp.eq.f32.partialorder %v51, %v94
    %vm118 = vcmp.eq.f32.partialorder %v52, %v94
    %vm119 = vcmp.eq.f32.partialorder %v53, %v94
    %vm120 = vcmp.eq.f32.partialorder %v54, %v94
    %vm121 = vcmp.eq.f32.partialorder %v55, %v94
    %vm122 = vcmp.eq.f32.partialorder %v56, %v94
    %vm123 = vcmp.eq.f32.partialorder %v57, %v94
    %vm124 = vcmp.eq.f32.partialorder %v58, %v94
    %vm125 = vcmp.eq.f32.partialorder %v59, %v94
    %vm126 = vcmp.eq.f32.partialorder %v60, %v94
    %vm127 = vcmp.lt.f32.partialorder %v25, 0.5
    %v128 = vsel %vm127, 1, 0
    %v129 = vperm.slane %v128, 0
    %vm130 = vcmp.eq.s32.totalorder %v129, 1
    %vm131 = vmand %vm111, %vm130
    %vm132 = vmand %vm112, %vm130
    %vm133 = vmand %vm113, %vm130
    %vm134 = vmand %vm114, %vm130
    %vm135 = vmand %vm115, %vm130
    %vm136 = vmand %vm116, %vm130
    %vm137 = vmand %vm117, %vm130
    %vm138 = vmand %vm118, %vm130
    %vm139 = vmand %vm119, %vm130
    %vm140 = vmand %vm120, %vm130
    %vm141 = vmand %vm121, %vm130
    %vm142 = vmand %vm122, %vm130
    %vm143 = vmand %vm123, %vm130
    %vm144 = vmand %vm124, %vm130
    %vm145 = vmand %vm125, %vm130
    %vm146 = vmand %vm126, %vm130
    %vm147 = vmor %vm95, %vm131
    %vm148 = vmor %vm96, %vm132
    %vm149 = vmor %vm97, %vm133
    %vm150 = vmor %vm98, %vm134
    %vm151 = vmor %vm99, %vm135
    %vm152 = vmor %vm100, %vm136
    %vm153 = vmor %vm101, %vm137
    %vm154 = vmor %vm102, %vm138
    %vm155 = vmor %vm103, %vm139
    %vm156 = vmor %vm104, %vm140
    %vm157 = vmor %vm105, %vm141
    %vm158 = vmor %vm106, %vm142
    %vm159 = vmor %vm107, %vm143
    %vm160 = vmor %vm108, %vm144
    %vm161 = vmor %vm109, %vm145
    %vm162 = vmor %vm110, %vm146
    %v163 = vsel %vm147, 1, 0
    %v164 = vsel %vm148, 1, 0
    %v165 = vsel %vm149, 1, 0
    %v166 = vsel %vm150, 1, 0
    %v167 = vsel %vm151, 1, 0
    %v168 = vsel %vm152, 1, 0
    %v169 = vsel %vm153, 1, 0
    %v170 = vsel %vm154, 1, 0
    %v171 = vsel %vm155, 1, 0
    %v172 = vsel %vm156, 1, 0
    %v173 = vsel %vm157, 1, 0
    %v174 = vsel %vm158, 1, 0
    %v175 = vsel %vm159, 1, 0
    %v176 = vsel %vm160, 1, 0
    %v177 = vsel %vm161, 1, 0
    %v178 = vsel %vm162, 1, 0
    %v179 = vcvt.s32.f32 %v163
    %v180 = vcvt.s32.f32 %v164
    %v181 = vcvt.s32.f32 %v165
    %v182 = vcvt.s32.f32 %v166
    %v183 = vcvt.s32.f32 %v167
    %v184 = vcvt.s32.f32 %v168
    %v185 = vcvt.s32.f32 %v169
    %v186 = vcvt.s32.f32 %v170
    %v187 = vcvt.s32.f32 %v171
    %v188 = vcvt.s32.f32 %v172
    %v189 = vcvt.s32.f32 %v173
    %v190 = vcvt.s32.f32 %v174
    %v191 = vcvt.s32.f32 %v175
    %v192 = vcvt.s32.f32 %v176
    %v193 = vcvt.s32.f32 %v177
    %v194 = vcvt.s32.f32 %v178
    %vm195 = vcmp.gt.f32.partialorder %v78, %v61
    %vm196 = vcmp.gt.f32.partialorder %v79, %v61
    %vm197 = vcmp.gt.f32.partialorder %v80, %v61
    %vm198 = vcmp.gt.f32.partialorder %v81, %v61
    %vm199 = vcmp.gt.f32.partialorder %v82, %v61
    %vm200 = vcmp.gt.f32.partialorder %v83, %v61
    %vm201 = vcmp.gt.f32.partialorder %v84, %v61
    %vm202 = vcmp.gt.f32.partialorder %v85, %v61
    %vm203 = vcmp.gt.f32.partialorder %v86, %v61
    %vm204 = vcmp.gt.f32.partialorder %v87, %v61
    %vm205 = vcmp.gt.f32.partialorder %v88, %v61
    %vm206 = vcmp.gt.f32.partialorder %v89, %v61
    %vm207 = vcmp.gt.f32.partialorder %v90, %v61
    %vm208 = vcmp.gt.f32.partialorder %v91, %v61
    %vm209 = vcmp.gt.f32.partialorder %v92, %v61
    %vm210 = vcmp.gt.f32.partialorder %v93, %v61
    %v211 = vsel %vm195, 1, 0
    %v212 = vsel %vm196, 1, 0
    %v213 = vsel %vm197, 1, 0
    %v214 = vsel %vm198, 1, 0
    %v215 = vsel %vm199, 1, 0
    %v216 = vsel %vm200, 1, 0
    %v217 = vsel %vm201, 1, 0
    %v218 = vsel %vm202, 1, 0
    %v219 = vsel %vm203, 1, 0
    %v220 = vsel %vm204, 1, 0
    %v221 = vsel %vm205, 1, 0
    %v222 = vsel %vm206, 1, 0
    %v223 = vsel %vm207, 1, 0
    %v224 = vsel %vm208, 1, 0
    %v225 = vsel %vm209, 1, 0
    %v226 = vsel %vm210, 1, 0
    %v227 = vcvt.s32.f32 %v211
    %v228 = vcvt.s32.f32 %v212
    %v229 = vcvt.s32.f32 %v213
    %v230 = vcvt.s32.f32 %v214
    %v231 = vcvt.s32.f32 %v215
    %v232 = vcvt.s32.f32 %v216
    %v233 = vcvt.s32.f32 %v217
    %v234 = vcvt.s32.f32 %v218
    %v235 = vcvt.s32.f32 %v219
    %v236 = vcvt.s32.f32 %v220
    %v237 = vcvt.s32.f32 %v221
    %v238 = vcvt.s32.f32 %v222
    %v239 = vcvt.s32.f32 %v223
    %v240 = vcvt.s32.f32 %v224
    %v241 = vcvt.s32.f32 %v225
    %v242 = vcvt.s32.f32 %v226
    %vm243 = vcmp.ge.f32.partialorder %v78, %v61
    %vm244 = vcmp.ge.f32.partialorder %v79, %v61
    %vm245 = vcmp.ge.f32.partialorder %v80, %v61
    %vm246 = vcmp.ge.f32.partialorder %v81, %v61
    %vm247 = vcmp.ge.f32.partialorder %v82, %v61
    %vm248 = vcmp.ge.f32.partialorder %v83, %v61
    %vm249 = vcmp.ge.f32.partialorder %v84, %v61
    %vm250 = vcmp.ge.f32.partialorder %v85, %v61
    %vm251 = vcmp.ge.f32.partialorder %v86, %v61
    %vm252 = vcmp.ge.f32.partialorder %v87, %v61
    %vm253 = vcmp.ge.f32.partialorder %v88, %v61
    %vm254 = vcmp.ge.f32.partialorder %v89, %v61
    %vm255 = vcmp.ge.f32.partialorder %v90, %v61
    %vm256 = vcmp.ge.f32.partialorder %v91, %v61
    %vm257 = vcmp.ge.f32.partialorder %v92, %v61
    %vm258 = vcmp.ge.f32.partialorder %v93, %v61
    %v259 = vsel %vm243, 1, 0
    %v260 = vsel %vm244, 1, 0
    %v261 = vsel %vm245, 1, 0
    %v262 = vsel %vm246, 1, 0
    %v263 = vsel %vm247, 1, 0
    %v264 = vsel %vm248, 1, 0
    %v265 = vsel %vm249, 1, 0
    %v266 = vsel %vm250, 1, 0
    %v267 = vsel %vm251, 1, 0
    %v268 = vsel %vm252, 1, 0
    %v269 = vsel %vm253, 1, 0
    %v270 = vsel %vm254, 1, 0
    %v271 = vsel %vm255, 1, 0
    %v272 = vsel %vm256, 1, 0
    %v273 = vsel %vm257, 1, 0
    %v274 = vsel %vm258, 1, 0
    %v275 = vcvt.s32.f32 %v259
    %v276 = vcvt.s32.f32 %v260
    %v277 = vcvt.s32.f32 %v261
    %v278 = vcvt.s32.f32 %v262
    %v279 = vcvt.s32.f32 %v263
    %v280 = vcvt.s32.f32 %v264
    %v281 = vcvt.s32.f32 %v265
    %v282 = vcvt.s32.f32 %v266
    %v283 = vcvt.s32.f32 %v267
    %v284 = vcvt.s32.f32 %v268
    %v285 = vcvt.s32.f32 %v269
    %v286 = vcvt.s32.f32 %v270
    %v287 = vcvt.s32.f32 %v271
    %v288 = vcvt.s32.f32 %v272
    %v289 = vcvt.s32.f32 %v273
    %v290 = vcvt.s32.f32 %v274
    %v291 = vadd.f32 %v227, %v275
    %v292 = vadd.f32 %v228, %v276
    %v293 = vadd.f32 %v229, %v277
    %v294 = vadd.f32 %v230, %v278
    %v295 = vadd.f32 %v231, %v279
    %v296 = vadd.f32 %v232, %v280
    %v297 = vadd.f32 %v233, %v281
    %v298 = vadd.f32 %v234, %v282
    %v299 = vadd.f32 %v235, %v283
    %v300 = vadd.f32 %v236, %v284
    %v301 = vadd.f32 %v237, %v285
    %v302 = vadd.f32 %v238, %v286
    %v303 = vadd.f32 %v239, %v287
    %v304 = vadd.f32 %v240, %v288
    %v305 = vadd.f32 %v241, %v289
    %v306 = vadd.f32 %v242, %v290
    %v307 = vmul.f32 %v179, %v291
    %v308 = vmul.f32 %v180, %v292
    %v309 = vmul.f32 %v181, %v293
    %v310 = vmul.f32 %v182, %v294
    %v311 = vmul.f32 %v183, %v295
    %v312 = vmul.f32 %v184, %v296
    %v313 = vmul.f32 %v185, %v297
    %v314 = vmul.f32 %v186, %v298
    %v315 = vmul.f32 %v187, %v299
    %v316 = vmul.f32 %v188, %v300
    %v317 = vmul.f32 %v189, %v301
    %v318 = vmul.f32 %v190, %v302
    %v319 = vmul.f32 %v191, %v303
    %v320 = vmul.f32 %v192, %v304
    %v321 = vmul.f32 %v193, %v305
    %v322 = vmul.f32 %v194, %v306
    %v323 = vadd.f32 %v307, %v308
    %v324 = vadd.f32 %v323, %v309
    %v325 = vadd.f32 %v324, %v310
    %v326 = vadd.f32 %v325, %v311
    %v327 = vadd.f32 %v326, %v312
    %v328 = vadd.f32 %v327, %v313
    %v329 = vadd.f32 %v328, %v314
    %v330 = vadd.f32 %v329, %v315
    %v331 = vadd.f32 %v330, %v316
    %v332 = vadd.f32 %v331, %v317
    %v333 = vadd.f32 %v332, %v318
    %v334 = vadd.f32 %v333, %v319
    %v335 = vadd.f32 %v334, %v320
    %v336 = vadd.f32 %v335, %v321
    %v337 = vadd.f32 %v336, %v322
    %338 = vadd.xlane.f32.xlu0 %v337
    %v339 = vpop.xlane.xlu0 %338
    %v340 = vrot.slane %v339, 4
    %v341 = vadd.f32 %v339, %v340
    %v342 = vrot.slane %v341, 2
    %v343 = vadd.f32 %v341, %v342
    %v344 = vrot.slane %v343, 1
    %v345 = vadd.f32 %v343, %v344
    %s346 = vtos %v345
    %v347 = vadd.f32 %v179, %v180
    %v348 = vadd.f32 %v347, %v181
    %v349 = vadd.f32 %v348, %v182
    %v350 = vadd.f32 %v349, %v183
    %v351 = vadd.f32 %v350, %v184
    %v352 = vadd.f32 %v351, %v185
    %v353 = vadd.f32 %v352, %v186
    %v354 = vadd.f32 %v353, %v187
    %v355 = vadd.f32 %v354, %v188
    %v356 = vadd.f32 %v355, %v189
    %v357 = vadd.f32 %v356, %v190
    %v358 = vadd.f32 %v357, %v191
    %v359 = vadd.f32 %v358, %v192
    %v360 = vadd.f32 %v359, %v193
    %v361 = vadd.f32 %v360, %v194
    %362 = vadd.xlane.f32.xlu0 %v361
    %v363 = vpop.xlane.xlu0 %362
    %v364 = vrot.slane %v363, 4
    %v365 = vadd.f32 %v363, %v364
    %v366 = vrot.slane %v365, 2
    %v367 = vadd.f32 %v365, %v366
    %v368 = vrot.slane %v367, 1
    %v369 = vadd.f32 %v367, %v368
    %s370 = vtos %v369
    %p371 = scmp.gt.f32.partialorder %s370, 0.0
    %s372 = smul.f32 %s346, 0.5
    %s373 = smax.f32 %s370, 1.0
    %v374 = vstv %s373
    %v375 = vrcp.pop %v374
    %v376 = vmul.f32 %v374, %v375
    %v377 = vsub.f32 1.0, %v376
    %v378 = vmul.f32 %v375, %v377
    %v379 = vadd.f32 %v375, %v378
    %vm380 = vweird.f32 %v374
    %vm381 = vweird.f32 %v375
    %vm382 = vmor %vm380, %vm381
    %v383 = vsel %vm382, %v375, %v379
    %v384 = vand.u32 2147483647, %v374
    %vm385 = vcmp.eq.f32.partialorder %v384, 8.507059e+37
    %v386 = vand.u32 %v374, 2147483648
    %v387 = vor.u32 1.1754944e-38, %v386
    %v388 = vsel %vm385, %v387, %v383
    %s389 = vtos %v388
    %s390 = smul.f32 %s372, %s389
    %s391 = scalar_select %p371, %s390, 0.5
    %s392 = ssub.f32 1.0, %s391
    %s393 = scalar_lea.smem [#allocation5], 0
    %394 = sst [smem:[%s393]] %s392
    // Predicated region
    $region10: #{tpu_custom_call.1} parent=1 // pred_check
      _
    $region11: #{tpu_custom_call.1} parent=1 // pred_check_branch
      %396 = sbr.rel (0) target = $region13
    $region12: #{tpu_custom_call.1} parent=1 // pred_region
      %398 = vsyncadd [#allocation4], 0
      %s400 = sshll.u32 %s1, 4
      %s401 = int_to_ptr.hbm [resolvable:$true] %s400
      %403 = dma.smem_to_hbm [#allocation5], 16, %s401, [#allocation4]
    $region13: #{tpu_custom_call.1} parent=1 // pred_fallthru
      _
    // Predicated region
    $region14: #{tpu_custom_call.1} parent=1 // pred_check
      _
    $region15: #{tpu_custom_call.1} parent=1 // pred_check_branch
      %405 = sbr.rel (0) target = $region17
    $region16: #{tpu_custom_call.1} parent=1 // pred_region
      %407 = dma.done [#allocation4], 16
    $region17: #{tpu_custom_call.1} parent=1 // pred_fallthru
      _
    %408 = sfence
    %409 = vsyncpa [#allocation3], 1
    %410 = vsyncpa [#allocation4], 1

</llo_original>
